<compile_context>
chip_gen: v7x
topology: tpu7x:2x2x1
jax: 0.10.0
libtpu: 0.0.40
codegen_flags: <defaults>
</compile_context>

<pallas_src>
import functools

import jax
import jax.numpy as jnp
from jax import lax
from jax.experimental import pallas as pl
from jax.experimental.pallas import tpu as pltpu


def _ce_kernel(ignore_index, hw, tp, npi, split, nh, weighted_heads,
               any_weighted, needs_tail_mask, *args):
    """Fused cross-entropy accumulation kernel.

    Per grid step every head tile is (C, tp): classes on the sublane axis,
    pixels on the lane axis, so logsumexp is a sublane reduce and the
    target-logit gather is a one-hot multiply + sublane sum.

    Accumulated per chunk (chunk = batch element x optional pixel split):
      for each head h:          sum_i CE_i            (unweighted numerator)
      for weighted heads only:  sum_i w[t_i] * CE_i   (weighted numerator)
      shared:                   sum_i 1               (unweighted denominator)
      if any weighted:          sum_i w[t_i]          (weighted denominator)
    """
    head_refs = args[:nh]
    target_ref = args[nh]
    k = nh + 1
    weight_ref = None
    if any_weighted:
        weight_ref = args[k]
        k += 1
    n_out = nh + sum(weighted_heads) + 1 + (1 if any_weighted else 0)
    out_refs = args[k:k + n_out]
    acc_refs = args[k + n_out:]

    p = pl.program_id(0)          # chunk index (batch x pixel-split)
    i = pl.program_id(1)          # pixel tile within the chunk

    @pl.when(i == 0)
    def _init():
        for a in acc_refs:
            a[...] = jnp.zeros_like(a)

    t = target_ref[...]                                     # (1, tp) int32
    C = head_refs[0].shape[0]

    valid = t != ignore_index
    if needs_tail_mask:
        # Mask ragged / duplicated (clamped) lanes via the *unclamped* global
        # pixel index. Garbage logits/targets in those lanes are harmless:
        # the final per-lane masking below uses selects, so NaN/inf from the
        # unselected branch never propagates.
        if split == 1:
            blk = i
        else:
            blk = (p % split) * npi + i
        lane = lax.broadcasted_iota(jnp.int32, t.shape, 1)   # (1, tp)
        valid = valid & ((blk * tp + lane) < hw)

    # Single f32 one-hot mask, reused for the target-logit gather and w_pix.
    cls = lax.broadcasted_iota(jnp.int32, (C, 1), 0)         # (C, 1)
    onehot = (cls == t).astype(jnp.float32)                  # (C, tp)
    if any_weighted:
        w = weight_ref[...].astype(jnp.float32)              # (C, 1)
        w_pix = jnp.sum(onehot * w, axis=0, keepdims=True)   # (1, tp)

    updates = []
    for h in range(nh):
        x = head_refs[h][...].astype(jnp.float32)            # (C, tp)
        # numerically stable log-sum-exp over the class (sublane) axis
        m = jnp.max(x, axis=0, keepdims=True)                                # (1, tp)
        lse = m + jnp.log(jnp.sum(jnp.exp(x - m), axis=0, keepdims=True))    # (1, tp)
        x_t = jnp.sum(onehot * x, axis=0, keepdims=True)                     # (1, tp)
        ce = lse - x_t                                                       # (1, tp)
        updates.append(jnp.where(valid, ce, 0.0))
        if weighted_heads[h]:
            updates.append(jnp.where(valid, ce * w_pix, 0.0))
    updates.append(valid.astype(jnp.float32))
    if any_weighted:
        updates.append(jnp.where(valid, w_pix, 0.0))

    # lane-wise (VPU) accumulation; no cross-lane work on the hot path
    for a, u in zip(acc_refs, updates):
        a[...] = a[...] + u

    @pl.when(i == pl.num_programs(1) - 1)
    def _finalize():
        for o, a in zip(out_refs, acc_refs):
            o[...] = jnp.sum(a[...], axis=1, keepdims=True)   # single XLU reduce


def _ce_sums(heads, target, *, weight=None, weighted_heads=None,
             ignore_index=255, tp_max=32768, vmem_budget=28 << 20):
    """Streams `heads` (list of (N,C,H,W) logits sharing one (N,H,W) target)
    through ONE fused Pallas pass (every logits byte read from HBM exactly
    once, in its native dtype). Returns:
        num_u  : per-head unweighted CE sums
        num_w  : per-head class-weighted CE sums (None for unweighted heads)
        den_u  : number of valid (non-ignored) pixels
        den_w  : sum of per-pixel class weights over valid pixels (or None)
    """
    nh = len(heads)
    if weighted_heads is None:
        weighted_heads = (False,) * nh
    weighted_heads = tuple(bool(x) for x in weighted_heads)
    any_weighted = any(weighted_heads)
    if any_weighted and weight is None:
        raise ValueError("a weighted head was requested but no class weights given")

    N, C, H, W = heads[0].shape
    for hd in heads:
        if hd.shape != (N, C, H, W):
            raise ValueError(f"all heads must share shape {(N, C, H, W)}, got {hd.shape}")
    if target.shape != (N, H, W):
        raise ValueError(f"target shape {target.shape} != {(N, H, W)}")
    HW = H * W

    # Free reshapes only -- no transpose, no pad, no dtype widening.
    xs = [hd.reshape(N, C, HW) for hd in heads]
    t = target.reshape(N, 1, HW).astype(jnp.int32)

    n_out = nh + sum(weighted_heads) + 1 + (1 if any_weighted else 0)

    # ---- adaptive pixel-tile size (VMEM-budget aware) -----------------------
    per_lane = sum(C * jnp.dtype(hd.dtype).itemsize * 2 for hd in heads)  # dbl-buffered logits
    per_lane += 4 * 2              # int32 target tile, double-buffered
    per_lane += n_out * 4          # f32 lane accumulators
    tp_budget = max(128, (vmem_budget // per_lane) // 128 * 128)
    tp_cap = -(-HW // 128) * 128   # round HW up to a lane multiple
    tp_eff = max(128, min(tp_max, tp_budget, tp_cap))
    n_blocks = -(-HW // tp_eff)

    # ---- chunking: batch axis, plus a pixel split when N==1 (v7x megacore) --
    split = 2 if (N == 1 and n_blocks >= 2) else 1
    npi = -(-n_blocks // split)
    P = N * split
    needs_tail_mask = (HW % tp_eff != 0) or (split * npi != n_blocks)

    inputs = list(xs) + [t]
    if any_weighted:
        w = jnp.asarray(weight, jnp.float32).reshape(C, 1)
        inputs.append(w)

    def px_block(p, i):
        if split == 1:
            blk = i
        else:
            blk = (p % split) * npi + i
        if split * npi != n_blocks:
            # last chunk may overhang; clamp (duplicated block is fully masked
            # in-kernel because its unclamped global pixel index is >= HW)
            blk = jnp.minimum(blk, n_blocks - 1)
        return blk

    def batch_idx(p):
        return p if split == 1 else p // split

    in_specs = [pl.BlockSpec((None, C, tp_eff),
                             lambda p, i: (batch_idx(p), 0, px_block(p, i)))
                for _ in range(nh)]
    in_specs.append(pl.BlockSpec((None, 1, tp_eff),
                                 lambda p, i: (batch_idx(p), 0, px_block(p, i))))
    if any_weighted:
        in_specs.append(pl.BlockSpec((C, 1), lambda p, i: (0, 0)))   # resident

    out_specs = tuple(pl.BlockSpec((None, 1, 1), lambda p, i: (p, 0, 0))
                      for _ in range(n_out))
    out_shape = tuple(jax.ShapeDtypeStruct((P, 1, 1), jnp.float32)
                      for _ in range(n_out))
    scratch = [pltpu.VMEM((1, tp_eff), jnp.float32) for _ in range(n_out)]

    kern = functools.partial(
        _ce_kernel, ignore_index, HW, tp_eff, npi, split, nh,
        weighted_heads, any_weighted, needs_tail_mask)

    vmem_limit = int(max(32 << 20, per_lane * tp_eff + (8 << 20)))

    outs = pl.pallas_call(
        kern,
        out_shape=out_shape,
        grid_spec=pltpu.PrefetchScalarGridSpec(
            num_scalar_prefetch=0,
            grid=(P, npi),
            in_specs=in_specs,
            out_specs=out_specs,
            scratch_shapes=scratch,
        ),
        compiler_params=pltpu.CompilerParams(
            dimension_semantics=("parallel", "arbitrary"),
            vmem_limit_bytes=vmem_limit),
    )(*inputs)

    sums = [jnp.sum(o) for o in outs]   # reduce the tiny per-chunk partials

    num_u, num_w = [], []
    k = 0
    for h in range(nh):
        num_u.append(sums[k]); k += 1
        if weighted_heads[h]:
            num_w.append(sums[k]); k += 1
        else:
            num_w.append(None)
    den_u = sums[k]; k += 1
    den_w = sums[k] if any_weighted else None
    return num_u, num_w, den_u, den_w


class Criterion:
    """JAX/Pallas port of the PyTorch Criterion module (forward pass only)."""

    def __init__(self, aux_weight, ignore_index=255, use_weight=False):
        self._aux_weight = aux_weight
        self._ignore_index = ignore_index
        self.use_weight = use_weight
        if use_weight:
            # deterministic weights from the module's __init__
            self._weights = jnp.array(
                [0.0, 0.0, 0.0, 1.0, 1.0, 1.0, 1.0, 0.0, 0.0, 1.0,
                 0.0, 0.0, 1.0, 0.0, 1.0, 0.0, 1.0, 1.0, 1.0], jnp.float32)
        else:
            self._weights = None

    def forward(self, preds, target):
        h, w = target.shape[1], target.shape[2]
        if self._aux_weight > 0:
            main_pred, aux_pred = preds
            main_h, main_w = main_pred.shape[2], main_pred.shape[3]
            aux_h, aux_w = aux_pred.shape[2], aux_pred.shape[3]
            assert (len(preds) == 2 and main_h == aux_h and main_w == aux_w
                    and main_h == h and main_w == w)
            weighted_heads = (True, False) if self.use_weight else (False, False)
            num_u, num_w, den_u, den_w = _ce_sums(
                [main_pred, aux_pred], target,
                weight=self._weights if self.use_weight else None,
                weighted_heads=weighted_heads,
                ignore_index=self._ignore_index)
            loss1 = num_u[0] / den_u
            if self.use_weight:
                # TODO(synk): den_w == 0 (all valid pixels in zero-weight
                # classes) divides by zero -- identical to the torch semantics.
                loss1 = loss1 + num_w[0] / den_w
            loss2 = num_u[1] / den_u
            loss = loss1 + self._aux_weight * loss2
        else:
            pred_h, pred_w = preds.shape[2], preds.shape[3]
            assert pred_h == h and pred_w == w
            num_u, _, den_u, _ = _ce_sums(
                [preds], target, ignore_index=self._ignore_index)
            loss = num_u[0] / den_u
        return loss

    __call__ = forward


def _reference_ce(logits, target, weight=None, ignore_index=255):
    """Pure-JAX reference matching nn.CrossEntropyLoss semantics."""
    N, C, H, W = logits.shape
    x = jnp.transpose(logits, (0, 2, 3, 1)).reshape(-1, C).astype(jnp.float32)
    t = target.reshape(-1).astype(jnp.int32)
    valid = t != ignore_index
    t_safe = jnp.where(valid, t, 0)
    logp = jax.nn.log_softmax(x, axis=-1)
    nll = -jnp.take_along_axis(logp, t_safe[:, None], axis=-1)[:, 0]
    if weight is None:
        w_pix = jnp.ones_like(nll)
    else:
        w_pix = jnp.asarray(weight, jnp.float32)[t_safe]
    num = jnp.sum(jnp.where(valid, nll * w_pix, 0.0))
    den = jnp.sum(jnp.where(valid, w_pix, 0.0))
    return num / den


if __name__ == "__main__":
    key = jax.random.PRNGKey(0)
    k1, k2, k3, k4 = jax.random.split(key, 4)

    N, C, H, W = 2, 19, 16, 16
    main_pred = jax.random.normal(k1, (N, C, H, W), jnp.float32)
    aux_pred = jax.random.normal(k2, (N, C, H, W), jnp.float32)
    target = jax.random.randint(k3, (N, H, W), 0, C).astype(jnp.int32)
    ignore_mask = jax.random.bernoulli(k4, 0.1, (N, H, W))
    target = jnp.where(ignore_mask, 255, target)

    # 1) dual-head, unweighted
    criterion = Criterion(aux_weight=0.4, ignore_index=255, use_weight=False)
    loss = jax.block_until_ready(criterion((main_pred, aux_pred), target))
    ref = (_reference_ce(main_pred, target)
           + 0.4 * _reference_ce(aux_pred, target))
    assert jnp.allclose(loss, ref, rtol=1e-4, atol=1e-5), (loss, ref)

    # 2) dual-head with class weights on the main head (fused weighted pass)
    criterion_w = Criterion(aux_weight=0.4, ignore_index=255, use_weight=True)
    loss_w = jax.block_until_ready(criterion_w((main_pred, aux_pred), target))
    ref_w = (_reference_ce(main_pred, target)
             + _reference_ce(main_pred, target, weight=criterion_w._weights)
             + 0.4 * _reference_ce(aux_pred, target))
    assert jnp.allclose(loss_w, ref_w, rtol=1e-4, atol=1e-5), (loss_w, ref_w)

    # 3) single-head, non-128-multiple spatial size -> ragged tail handled
    #    entirely in-kernel (no wrapper pad / extra HBM copy)
    H2, W2 = 20, 20
    k5, k6, k7 = jax.random.split(k4, 3)
    pred2 = jax.random.normal(k5, (N, C, H2, W2), jnp.float32)
    tgt2 = jax.random.randint(k6, (N, H2, W2), 0, C).astype(jnp.int32)
    tgt2 = jnp.where(jax.random.bernoulli(k7, 0.1, (N, H2, W2)), 255, tgt2)
    criterion0 = Criterion(aux_weight=0.0, ignore_index=255, use_weight=False)
    loss0 = jax.block_until_ready(criterion0(pred2, tgt2))
    ref0 = _reference_ce(pred2, tgt2)
    assert jnp.allclose(loss0, ref0, rtol=1e-4, atol=1e-5), (loss0, ref0)

    # 4) same shape but bf16 logits -> native-dtype streaming path
    pred2b = pred2.astype(jnp.bfloat16)
    loss0b = jax.block_until_ready(criterion0(pred2b, tgt2))
    ref0b = _reference_ce(pred2b, tgt2)
    assert jnp.allclose(loss0b, ref0b, rtol=1e-3, atol=1e-4), (loss0b, ref0b)

    # 5) N==1 with tiny forced tiles: exercises the megacore pixel split,
    #    the clamped duplicate block and the ragged-tail mask together.
    k8, k9 = jax.random.split(k7, 2)
    C3, H3, W3 = 7, 19, 19
    pred3 = jax.random.normal(k8, (1, C3, H3, W3), jnp.float32)
    tgt3 = jax.random.randint(k9, (1, H3, W3), 0, C3).astype(jnp.int32)
    nu3, _, du3, _ = _ce_sums([pred3], tgt3, ignore_index=255, tp_max=128)
    loss3 = jax.block_until_ready(nu3[0] / du3)
    ref3 = _reference_ce(pred3, tgt3)
    assert jnp.allclose(loss3, ref3, rtol=1e-4, atol=1e-5), (loss3, ref3)

    print("KERNEL_OK")
</pallas_src>

<mosaic_0001>
module attributes {stable_mosaic.version = 11 : i64} {
  func.func @_ce_kernel(%arg0: i32, %arg1: i32, %arg2: memref<1x19x256xf32, #tpu.memory_space<vmem>>, %arg3: memref<1x19x256xf32, #tpu.memory_space<vmem>>, %arg4: memref<1x1x256xi32, #tpu.memory_space<vmem>>, %arg5: memref<1x1x1xf32, #tpu.memory_space<vmem>>, %arg6: memref<1x1x1xf32, #tpu.memory_space<vmem>>, %arg7: memref<1x1x1xf32, #tpu.memory_space<vmem>>, %arg8: memref<1x256xf32, #tpu.memory_space<vmem>>, %arg9: memref<1x256xf32, #tpu.memory_space<vmem>>, %arg10: memref<1x256xf32, #tpu.memory_space<vmem>>) attributes {dimension_semantics = [#tpu.dimension_semantics<parallel>, #tpu.dimension_semantics<arbitrary>], iteration_bounds = array<i64: 2, 1>, scalar_prefetch = 0 : i64, scratch_operands = 3 : i64, tpu.core_type = #tpu.core_type<tc>, window_params = [{transform_indices = @transform_0, window_bounds = array<i64: 1, 19, 256>}, {transform_indices = @transform_1, window_bounds = array<i64: 1, 19, 256>}, {transform_indices = @transform_2, window_bounds = array<i64: 1, 1, 256>}, {transform_indices = @transform_3, window_bounds = array<i64: 1, 1, 1>}, {transform_indices = @transform_4, window_bounds = array<i64: 1, 1, 1>}, {transform_indices = @transform_5, window_bounds = array<i64: 1, 1, 1>}]} {
    %c0_i32 = arith.constant 0 : i32
    %0 = arith.cmpi eq, %arg1, %c0_i32 : i32
    %1 = arith.extui %0 : i1 to i32
    %c0_i32_0 = arith.constant 0 : i32
    %2 = arith.cmpi ne, %1, %c0_i32_0 : i32
    scf.if %2 {
      %cst_30 = arith.constant 0.000000e+00 : f32
      %61 = vector.broadcast %cst_30 : f32 to vector<1x256xf32>
      %c0_31 = arith.constant 0 : index
      %c0_32 = arith.constant 0 : index
      %62 = vector.load %arg8[%c0_31, %c0_32] : memref<1x256xf32, #tpu.memory_space<vmem>>, vector<1x256xf32>
      tpu.vector_store %arg8[%c0_31, %c0_32], %61 {strides = array<i32>} : memref<1x256xf32, #tpu.memory_space<vmem>>, vector<1x256xf32>,
      %cst_33 = arith.constant 0.000000e+00 : f32
      %63 = vector.broadcast %cst_33 : f32 to vector<1x256xf32>
      %c0_34 = arith.constant 0 : index
      %c0_35 = arith.constant 0 : index
      %64 = vector.load %arg9[%c0_34, %c0_35] : memref<1x256xf32, #tpu.memory_space<vmem>>, vector<1x256xf32>
      tpu.vector_store %arg9[%c0_34, %c0_35], %63 {strides = array<i32>} : memref<1x256xf32, #tpu.memory_space<vmem>>, vector<1x256xf32>,
      %cst_36 = arith.constant 0.000000e+00 : f32
      %65 = vector.broadcast %cst_36 : f32 to vector<1x256xf32>
      %c0_37 = arith.constant 0 : index
      %c0_38 = arith.constant 0 : index
      %66 = vector.load %arg10[%c0_37, %c0_38] : memref<1x256xf32, #tpu.memory_space<vmem>>, vector<1x256xf32>
      tpu.vector_store %arg10[%c0_37, %c0_38], %65 {strides = array<i32>} : memref<1x256xf32, #tpu.memory_space<vmem>>, vector<1x256xf32>,
    } else {
    }
    %c0 = arith.constant 0 : index
    %c0_1 = arith.constant 0 : index
    %c0_2 = arith.constant 0 : index
    %3 = vector.load %arg4[%c0, %c0_1, %c0_2] : memref<1x1x256xi32, #tpu.memory_space<vmem>>, vector<1x1x256xi32>
    %4 = vector.shape_cast %3 : vector<1x1x256xi32> to vector<1x256xi32>
    %c255_i32 = arith.constant 255 : i32
    %5 = vector.broadcast %c255_i32 : i32 to vector<1x256xi32>
    %6 = arith.cmpi ne, %4, %5 : vector<1x256xi32>
    %7 = tpu.iota {dimensions = array<i32: 0>} : vector<19x1xi32>
    %8 = vector.broadcast %7 : vector<19x1xi32> to vector<19x256xi32>
    %9 = vector.broadcast %4 : vector<1x256xi32> to vector<19x256xi32>
    %10 = arith.cmpi eq, %8, %9 : vector<19x256xi32>
    %11 = arith.extui %10 : vector<19x256xi1> to vector<19x256xi32>
    %12 = arith.sitofp %11 : vector<19x256xi32> to vector<19x256xf32>
    %c0_3 = arith.constant 0 : index
    %c0_4 = arith.constant 0 : index
    %c0_5 = arith.constant 0 : index
    %13 = vector.load %arg2[%c0_3, %c0_4, %c0_5] : memref<1x19x256xf32, #tpu.memory_space<vmem>>, vector<1x19x256xf32>
    %14 = vector.shape_cast %13 : vector<1x19x256xf32> to vector<19x256xf32>
    %cst = arith.constant dense<0xFF800000> : vector<256xf32>
    %15 = vector.multi_reduction <maximumf>, %14, %cst [0] : vector<19x256xf32> to vector<256xf32>
    %16 = vector.shape_cast %15 : vector<256xf32> to vector<1x256xf32>
    %17 = vector.broadcast %16 : vector<1x256xf32> to vector<19x256xf32>
    %18 = arith.subf %14, %17 : vector<19x256xf32>
    %19 = math.exp %18 : vector<19x256xf32>
    %cst_6 = arith.constant dense<0.000000e+00> : vector<256xf32>
    %20 = vector.multi_reduction <add>, %19, %cst_6 [0] : vector<19x256xf32> to vector<256xf32>
    %21 = vector.shape_cast %20 : vector<256xf32> to vector<1x256xf32>
    %22 = math.log %21 : vector<1x256xf32>
    %23 = arith.addf %16, %22 : vector<1x256xf32>
    %24 = arith.mulf %12, %14 : vector<19x256xf32>
    %cst_7 = arith.constant dense<0.000000e+00> : vector<256xf32>
    %25 = vector.multi_reduction <add>, %24, %cst_7 [0] : vector<19x256xf32> to vector<256xf32>
    %26 = vector.shape_cast %25 : vector<256xf32> to vector<1x256xf32>
    %27 = arith.subf %23, %26 : vector<1x256xf32>
    %cst_8 = arith.constant 0.000000e+00 : f32
    %28 = vector.broadcast %cst_8 : f32 to vector<1x256xf32>
    %29 = arith.select %6, %27, %28 : vector<1x256xi1>, vector<1x256xf32>
    %c0_9 = arith.constant 0 : index
    %c0_10 = arith.constant 0 : index
    %c0_11 = arith.constant 0 : index
    %30 = vector.load %arg3[%c0_9, %c0_10, %c0_11] : memref<1x19x256xf32, #tpu.memory_space<vmem>>, vector<1x19x256xf32>
    %31 = vector.shape_cast %30 : vector<1x19x256xf32> to vector<19x256xf32>
    %cst_12 = arith.constant dense<0xFF800000> : vector<256xf32>
    %32 = vector.multi_reduction <maximumf>, %31, %cst_12 [0] : vector<19x256xf32> to vector<256xf32>
    %33 = vector.shape_cast %32 : vector<256xf32> to vector<1x256xf32>
    %34 = vector.broadcast %33 : vector<1x256xf32> to vector<19x256xf32>
    %35 = arith.subf %31, %34 : vector<19x256xf32>
    %36 = math.exp %35 : vector<19x256xf32>
    %cst_13 = arith.constant dense<0.000000e+00> : vector<256xf32>
    %37 = vector.multi_reduction <add>, %36, %cst_13 [0] : vector<19x256xf32> to vector<256xf32>
    %38 = vector.shape_cast %37 : vector<256xf32> to vector<1x256xf32>
    %39 = math.log %38 : vector<1x256xf32>
    %40 = arith.addf %33, %39 : vector<1x256xf32>
    %41 = arith.mulf %12, %31 : vector<19x256xf32>
    %cst_14 = arith.constant dense<0.000000e+00> : vector<256xf32>
    %42 = vector.multi_reduction <add>, %41, %cst_14 [0] : vector<19x256xf32> to vector<256xf32>
    %43 = vector.shape_cast %42 : vector<256xf32> to vector<1x256xf32>
    %44 = arith.subf %40, %43 : vector<1x256xf32>
    %cst_15 = arith.constant 0.000000e+00 : f32
    %45 = vector.broadcast %cst_15 : f32 to vector<1x256xf32>
    %46 = arith.select %6, %44, %45 : vector<1x256xi1>, vector<1x256xf32>
    %47 = arith.extui %6 : vector<1x256xi1> to vector<1x256xi32>
    %48 = arith.sitofp %47 : vector<1x256xi32> to vector<1x256xf32>
    %c0_16 = arith.constant 0 : index
    %c0_17 = arith.constant 0 : index
    %49 = vector.load %arg8[%c0_16, %c0_17] : memref<1x256xf32, #tpu.memory_space<vmem>>, vector<1x256xf32>
    %50 = arith.addf %49, %29 : vector<1x256xf32>
    %c0_18 = arith.constant 0 : index
    %c0_19 = arith.constant 0 : index
    %51 = vector.load %arg8[%c0_18, %c0_19] : memref<1x256xf32, #tpu.memory_space<vmem>>, vector<1x256xf32>
    tpu.vector_store %arg8[%c0_18, %c0_19], %50 {strides = array<i32>} : memref<1x256xf32, #tpu.memory_space<vmem>>, vector<1x256xf32>,
    %c0_20 = arith.constant 0 : index
    %c0_21 = arith.constant 0 : index
    %52 = vector.load %arg9[%c0_20, %c0_21] : memref<1x256xf32, #tpu.memory_space<vmem>>, vector<1x256xf32>
    %53 = arith.addf %52, %46 : vector<1x256xf32>
    %c0_22 = arith.constant 0 : index
    %c0_23 = arith.constant 0 : index
    %54 = vector.load %arg9[%c0_22, %c0_23] : memref<1x256xf32, #tpu.memory_space<vmem>>, vector<1x256xf32>
    tpu.vector_store %arg9[%c0_22, %c0_23], %53 {strides = array<i32>} : memref<1x256xf32, #tpu.memory_space<vmem>>, vector<1x256xf32>,
    %c0_24 = arith.constant 0 : index
    %c0_25 = arith.constant 0 : index
    %55 = vector.load %arg10[%c0_24, %c0_25] : memref<1x256xf32, #tpu.memory_space<vmem>>, vector<1x256xf32>
    %56 = arith.addf %55, %48 : vector<1x256xf32>
    %c0_26 = arith.constant 0 : index
    %c0_27 = arith.constant 0 : index
    %57 = vector.load %arg10[%c0_26, %c0_27] : memref<1x256xf32, #tpu.memory_space<vmem>>, vector<1x256xf32>
    tpu.vector_store %arg10[%c0_26, %c0_27], %56 {strides = array<i32>} : memref<1x256xf32, #tpu.memory_space<vmem>>, vector<1x256xf32>,
    %c0_i32_28 = arith.constant 0 : i32
    %58 = arith.cmpi eq, %arg1, %c0_i32_28 : i32
    %59 = arith.extui %58 : i1 to i32
    %c0_i32_29 = arith.constant 0 : i32
    %60 = arith.cmpi ne, %59, %c0_i32_29 : i32
    scf.if %60 {
      %c0_30 = arith.constant 0 : index
      %c0_31 = arith.constant 0 : index
      %61 = vector.load %arg8[%c0_30, %c0_31] : memref<1x256xf32, #tpu.memory_space<vmem>>, vector<1x256xf32>
      %cst_32 = arith.constant dense<0.000000e+00> : vector<1xf32>
      %62 = vector.multi_reduction <add>, %61, %cst_32 [1] : vector<1x256xf32> to vector<1xf32>
      %63 = vector.shape_cast %62 : vector<1xf32> to vector<1x1xf32>
      %c0_33 = arith.constant 0 : index
      %c0_34 = arith.constant 0 : index
      %c0_35 = arith.constant 0 : index
      %64 = vector.load %arg5[%c0_33, %c0_34, %c0_35] : memref<1x1x1xf32, #tpu.memory_space<vmem>>, vector<1x1x1xf32>
      %65 = vector.shape_cast %64 : vector<1x1x1xf32> to vector<1x1xf32>
      %66 = vector.shape_cast %63 : vector<1x1xf32> to vector<1x1x1xf32>
      tpu.vector_store %arg5[%c0_33, %c0_34, %c0_35], %66 {strides = array<i32>} : memref<1x1x1xf32, #tpu.memory_space<vmem>>, vector<1x1x1xf32>,
      %c0_36 = arith.constant 0 : index
      %c0_37 = arith.constant 0 : index
      %67 = vector.load %arg9[%c0_36, %c0_37] : memref<1x256xf32, #tpu.memory_space<vmem>>, vector<1x256xf32>
      %cst_38 = arith.constant dense<0.000000e+00> : vector<1xf32>
      %68 = vector.multi_reduction <add>, %67, %cst_38 [1] : vector<1x256xf32> to vector<1xf32>
      %69 = vector.shape_cast %68 : vector<1xf32> to vector<1x1xf32>
      %c0_39 = arith.constant 0 : index
      %c0_40 = arith.constant 0 : index
      %c0_41 = arith.constant 0 : index
      %70 = vector.load %arg6[%c0_39, %c0_40, %c0_41] : memref<1x1x1xf32, #tpu.memory_space<vmem>>, vector<1x1x1xf32>
      %71 = vector.shape_cast %70 : vector<1x1x1xf32> to vector<1x1xf32>
      %72 = vector.shape_cast %69 : vector<1x1xf32> to vector<1x1x1xf32>
      tpu.vector_store %arg6[%c0_39, %c0_40, %c0_41], %72 {strides = array<i32>} : memref<1x1x1xf32, #tpu.memory_space<vmem>>, vector<1x1x1xf32>,
      %c0_42 = arith.constant 0 : index
      %c0_43 = arith.constant 0 : index
      %73 = vector.load %arg10[%c0_42, %c0_43] : memref<1x256xf32, #tpu.memory_space<vmem>>, vector<1x256xf32>
      %cst_44 = arith.constant dense<0.000000e+00> : vector<1xf32>
      %74 = vector.multi_reduction <add>, %73, %cst_44 [1] : vector<1x256xf32> to vector<1xf32>
      %75 = vector.shape_cast %74 : vector<1xf32> to vector<1x1xf32>
      %c0_45 = arith.constant 0 : index
      %c0_46 = arith.constant 0 : index
      %c0_47 = arith.constant 0 : index
      %76 = vector.load %arg7[%c0_45, %c0_46, %c0_47] : memref<1x1x1xf32, #tpu.memory_space<vmem>>, vector<1x1x1xf32>
      %77 = vector.shape_cast %76 : vector<1x1x1xf32> to vector<1x1xf32>
      %78 = vector.shape_cast %75 : vector<1x1xf32> to vector<1x1x1xf32>
      tpu.vector_store %arg7[%c0_45, %c0_46, %c0_47], %78 {strides = array<i32>} : memref<1x1x1xf32, #tpu.memory_space<vmem>>, vector<1x1x1xf32>,
    } else {
    }
    return
  }
  func.func @transform_0(%arg0: i32, %arg1: i32) -> (i32, i32, i32) {
    %c0_i32 = arith.constant 0 : i32
    %c0_i32_0 = arith.constant 0 : i32
    return %arg0, %c0_i32, %arg1 : i32, i32, i32
  }
  func.func @transform_1(%arg0: i32, %arg1: i32) -> (i32, i32, i32) {
    %c0_i32 = arith.constant 0 : i32
    %c0_i32_0 = arith.constant 0 : i32
    return %arg0, %c0_i32, %arg1 : i32, i32, i32
  }
  func.func @transform_2(%arg0: i32, %arg1: i32) -> (i32, i32, i32) {
    %c0_i32 = arith.constant 0 : i32
    %c0_i32_0 = arith.constant 0 : i32
    return %arg0, %c0_i32, %arg1 : i32, i32, i32
  }
  func.func @transform_3(%arg0: i32, %arg1: i32) -> (i32, i32, i32) {
    %c0_i32 = arith.constant 0 : i32
    %c0_i32_0 = arith.constant 0 : i32
    %c0_i32_1 = arith.constant 0 : i32
    return %arg0, %c0_i32, %c0_i32_0 : i32, i32, i32
  }
  func.func @transform_4(%arg0: i32, %arg1: i32) -> (i32, i32, i32) {
    %c0_i32 = arith.constant 0 : i32
    %c0_i32_0 = arith.constant 0 : i32
    %c0_i32_1 = arith.constant 0 : i32
    return %arg0, %c0_i32, %c0_i32_0 : i32, i32, i32
  }
  func.func @transform_5(%arg0: i32, %arg1: i32) -> (i32, i32, i32) {
    %c0_i32 = arith.constant 0 : i32
    %c0_i32_0 = arith.constant 0 : i32
    %c0_i32_1 = arith.constant 0 : i32
    return %arg0, %c0_i32, %c0_i32_0 : i32, i32, i32
  }
}

</mosaic_0001>

<llo_original>
// kernel: tpu_custom_call.1
$region0: #{tpu_custom_call.1}
  #allocation0 [shape = 'u32[]', space=smem, size = 0x4, offset = 0x4, fixed_abs, tag = 'smem constant byte address 0x4 - core index']
  #allocation1 [shape = 'u32[144,128]{1,0:T(1,128)}', space=vmem, size = 0x12000, scoped, tag = 'internal scratch']
  #allocation2 [shape = 'f32[1,256]{1,0:T(1,128)}', space=vmem, size = 0x400, scoped, tag = 'scratch operand']
  #allocation3 [shape = 'f32[1,256]{1,0:T(1,128)}', space=vmem, size = 0x400, scoped, tag = 'scratch operand']
  #allocation4 [shape = 'f32[1,256]{1,0:T(1,128)}', space=vmem, size = 0x400, scoped, tag = 'scratch operand']
  %s0 = inlined_call_operand.vmem [shape: f32[2,19,256], index: 0, kind: input, shape index: {}]
  %s1 = inlined_call_operand.vmem [shape: f32[2,19,256], index: 1, kind: input, shape index: {}]
  %s2 = inlined_call_operand.vmem [shape: s32[2,1,256], index: 2, kind: input, shape index: {}]
  %s3 = inlined_call_operand.vmem [shape: f32[2,1,1], index: 3, kind: output, shape index: {0}]
  %s4 = inlined_call_operand.vmem [shape: f32[2,1,1], index: 4, kind: output, shape index: {1}]
  %s5 = inlined_call_operand.vmem [shape: f32[2,1,1], index: 5, kind: output, shape index: {2}]
  %6 = xla_tuple %s3, %s4, %s5
  %s7 = sld [smem:[#allocation0]]
  $region69: #{tpu_custom_call.1} parent=0
    _
  %s9 = ssub.s32 1, %s7
  %s10 = scalar_select 0, %s9, %s7
  loop: start=0, step=1, limit=4
  $region2: #{tpu_custom_call.1} parent=0 // loop_pre_header
    _
  $region3: #{tpu_custom_call.1} parent=0 // loop_header
    %s12 = sphi 0, %s16
    %p13 = scmp.ge.s32.totalorder %s12, 4
    %s19 = sphi 0, %s31
    %s20 = sphi 0, %s27
    %s21 = sphi 0, %s19
    %s22 = sphi 0, %s20
    %s23 = sphi 0, %s21
    %s24 = sphi 0, %s22
    %s36 = sphi 0, %s38
    %s39 = sphi 0, %s36
    %s40 = sphi 0, %s39
    %s56 = sphi 0, %s40
    %s64 = sphi 0, %s66
    %s67 = sphi 0, %s64
    %s68 = sphi 0, %s67
    %s84 = sphi 0, %s68
    %s92 = sphi 0, %s94
    %s95 = sphi 0, %s92
    %s96 = sphi 0, %s95
    %s112 = sphi 0, %s96
    %s118 = sphi 0, %s120
    %s121 = sphi 0, %s118
    %s122 = sphi 0, %s121
    %s138 = sphi 0, %s122
    %s144 = sphi 0, %s146
    %s147 = sphi 0, %s144
    %s148 = sphi 0, %s147
    %s164 = sphi 0, %s148
    %s170 = sphi 0, %s172
    %s173 = sphi 0, %s170
    %s174 = sphi 0, %s173
    %s190 = sphi 0, %s174
  $region4: #{tpu_custom_call.1} parent=0 // loop_header_branch
    %15 = sbr.rel (%p13) target = $region8
  $region5: #{tpu_custom_call.1} parent=0 // loop_body
    %s17 = ssub.s32 %s12, 1
    %s18 = ssub.s32 %s12, 2
    %s25 = sadd.s32 1, %s20
    %p26 = scmp.ge.s32.totalorder %s25, 1
    %s27 = scalar_select %p26, 0, %s25
    %s28 = sadd.s32 1, %s19
    %s29 = scalar_select %p26, %s28, %s19
    %p30 = scmp.ge.s32.totalorder %s29, 2
    %s31 = scalar_select %p30, 0, %s29
    %s32 = ssub.s32 %s19, %s31
    %s33 = ssub.s32 %s20, %s27
    %s34 = sor.u32 %s32, %s33
    %p35 = scmp.eq.s32.totalorder %s34, 0
    %s37 = sadd.s32 %s36, 1
    %s38 = scalar_select %p35, %s36, %s37
    %p41 = pneg %p35
    %p42 = scmp.eq.s32.totalorder %s12, 1
    %p43 = por %p41, %p42
    %p44 = scmp.ne.s32.totalorder %s36, %s39
    %p45 = scmp.eq.s32.totalorder %s12, 0
    %p46 = por %p44, %p45
    %p47 = scmp.ne.s32.totalorder %s36, %s39
    %p48 = scmp.eq.s32.totalorder %s17, 1
    %p49 = por %p47, %p48
    %p50 = scmp.ne.s32.totalorder %s39, %s40
    %p51 = scmp.eq.s32.totalorder %s17, 0
    %p52 = por %p50, %p51
    %p53 = scmp.ne.s32.totalorder %s39, %s40
    %p54 = scmp.eq.s32.totalorder %s18, 1
    %p55 = por %p53, %p54
    %p57 = scmp.ne.s32.totalorder %s40, %s56
    %p58 = scmp.eq.s32.totalorder %s18, 0
    %p59 = por %p57, %p58
    %s60 = ssub.s32 %s19, %s31
    %s61 = ssub.s32 %s20, %s27
    %s62 = sor.u32 %s60, %s61
    %p63 = scmp.eq.s32.totalorder %s62, 0
    %s65 = sadd.s32 %s64, 1
    %s66 = scalar_select %p63, %s64, %s65
    %p69 = pneg %p63
    %p70 = scmp.eq.s32.totalorder %s12, 1
    %p71 = por %p69, %p70
    %p72 = scmp.ne.s32.totalorder %s64, %s67
    %p73 = scmp.eq.s32.totalorder %s12, 0
    %p74 = por %p72, %p73
    %p75 = scmp.ne.s32.totalorder %s64, %s67
    %p76 = scmp.eq.s32.totalorder %s17, 1
    %p77 = por %p75, %p76
    %p78 = scmp.ne.s32.totalorder %s67, %s68
    %p79 = scmp.eq.s32.totalorder %s17, 0
    %p80 = por %p78, %p79
    %p81 = scmp.ne.s32.totalorder %s67, %s68
    %p82 = scmp.eq.s32.totalorder %s18, 1
    %p83 = por %p81, %p82
    %p85 = scmp.ne.s32.totalorder %s68, %s84
    %p86 = scmp.eq.s32.totalorder %s18, 0
    %p87 = por %p85, %p86
    %s88 = ssub.s32 %s19, %s31
    %s89 = ssub.s32 %s20, %s27
    %s90 = sor.u32 %s88, %s89
    %p91 = scmp.eq.s32.totalorder %s90, 0
    %s93 = sadd.s32 %s92, 1
    %s94 = scalar_select %p91, %s92, %s93
    %p97 = pneg %p91
    %p98 = scmp.eq.s32.totalorder %s12, 1
    %p99 = por %p97, %p98
    %p100 = scmp.ne.s32.totalorder %s92, %s95
    %p101 = scmp.eq.s32.totalorder %s12, 0
    %p102 = por %p100, %p101
    %p103 = scmp.ne.s32.totalorder %s92, %s95
    %p104 = scmp.eq.s32.totalorder %s17, 1
    %p105 = por %p103, %p104
    %p106 = scmp.ne.s32.totalorder %s95, %s96
    %p107 = scmp.eq.s32.totalorder %s17, 0
    %p108 = por %p106, %p107
    %p109 = scmp.ne.s32.totalorder %s95, %s96
    %p110 = scmp.eq.s32.totalorder %s18, 1
    %p111 = por %p109, %p110
    %p113 = scmp.ne.s32.totalorder %s96, %s112
    %p114 = scmp.eq.s32.totalorder %s18, 0
    %p115 = por %p113, %p114
    %s116 = ssub.s32 %s19, %s31
    %p117 = scmp.eq.s32.totalorder %s116, 0
    %s119 = sadd.s32 %s118, 1
    %s120 = scalar_select %p117, %s118, %s119
    %p123 = pneg %p117
    %p124 = scmp.eq.s32.totalorder %s12, 1
    %p125 = por %p123, %p124
    %p126 = scmp.ne.s32.totalorder %s118, %s121
    %p127 = scmp.eq.s32.totalorder %s12, 0
    %p128 = por %p126, %p127
    %p129 = scmp.ne.s32.totalorder %s118, %s121
    %p130 = scmp.eq.s32.totalorder %s17, 1
    %p131 = por %p129, %p130
    %p132 = scmp.ne.s32.totalorder %s121, %s122
    %p133 = scmp.eq.s32.totalorder %s17, 0
    %p134 = por %p132, %p133
    %p135 = scmp.ne.s32.totalorder %s121, %s122
    %p136 = scmp.eq.s32.totalorder %s18, 1
    %p137 = por %p135, %p136
    %p139 = scmp.ne.s32.totalorder %s122, %s138
    %p140 = scmp.eq.s32.totalorder %s18, 0
    %p141 = por %p139, %p140
    %s142 = ssub.s32 %s19, %s31
    %p143 = scmp.eq.s32.totalorder %s142, 0
    %s145 = sadd.s32 %s144, 1
    %s146 = scalar_select %p143, %s144, %s145
    %p149 = pneg %p143
    %p150 = scmp.eq.s32.totalorder %s12, 1
    %p151 = por %p149, %p150
    %p152 = scmp.ne.s32.totalorder %s144, %s147
    %p153 = scmp.eq.s32.totalorder %s12, 0
    %p154 = por %p152, %p153
    %p155 = scmp.ne.s32.totalorder %s144, %s147
    %p156 = scmp.eq.s32.totalorder %s17, 1
    %p157 = por %p155, %p156
    %p158 = scmp.ne.s32.totalorder %s147, %s148
    %p159 = scmp.eq.s32.totalorder %s17, 0
    %p160 = por %p158, %p159
    %p161 = scmp.ne.s32.totalorder %s147, %s148
    %p162 = scmp.eq.s32.totalorder %s18, 1
    %p163 = por %p161, %p162
    %p165 = scmp.ne.s32.totalorder %s148, %s164
    %p166 = scmp.eq.s32.totalorder %s18, 0
    %p167 = por %p165, %p166
    %s168 = ssub.s32 %s19, %s31
    %p169 = scmp.eq.s32.totalorder %s168, 0
    %s171 = sadd.s32 %s170, 1
    %s172 = scalar_select %p169, %s170, %s171
    %p175 = pneg %p169
    %p176 = scmp.eq.s32.totalorder %s12, 1
    %p177 = por %p175, %p176
    %p178 = scmp.ne.s32.totalorder %s170, %s173
    %p179 = scmp.eq.s32.totalorder %s12, 0
    %p180 = por %p178, %p179
    %p181 = scmp.ne.s32.totalorder %s170, %s173
    %p182 = scmp.eq.s32.totalorder %s17, 1
    %p183 = por %p181, %p182
    %p184 = scmp.ne.s32.totalorder %s173, %s174
    %p185 = scmp.eq.s32.totalorder %s17, 0
    %p186 = por %p184, %p185
    %p187 = scmp.ne.s32.totalorder %s173, %s174
    %p188 = scmp.eq.s32.totalorder %s18, 1
    %p189 = por %p187, %p188
    %p191 = scmp.ne.s32.totalorder %s174, %s190
    %p192 = scmp.eq.s32.totalorder %s18, 0
    %p193 = por %p191, %p192
    %p194 = scmp.le.s32.totalorder 1, %s12
    %p195 = scmp.lt.s32.totalorder %s12, 3
    %p196 = pnand %p194, %p195
    %p197 = pneg %p196
    // Predicated region
    $region9: #{tpu_custom_call.1} parent=5 // pred_check
      _
    $region10: #{tpu_custom_call.1} parent=5 // pred_check_branch
      %199 = sbr.rel (%p196) target = $region12
    $region11: #{tpu_custom_call.1} parent=5 // pred_region
      %s200 = ssub.s32 %s12, 1
    $region12: #{tpu_custom_call.1} parent=5 // pred_fallthru
      _
    %p201 = scmp.lt.s32.totalorder %s12, 2
    // Predicated region
    $region13: #{tpu_custom_call.1} parent=5 // pred_check
      %p202 = pneg %p201
    $region14: #{tpu_custom_call.1} parent=5 // pred_check_branch
      %204 = sbr.rel (%p202) target = $region16
    $region15: #{tpu_custom_call.1} parent=5 // pred_region
      // Predicated region
      $region17: #{tpu_custom_call.1} parent=15 // pred_check
        %p205 = pneg %p46
      $region18: #{tpu_custom_call.1} parent=15 // pred_check_branch
        %207 = sbr.rel (%p205) target = $region20
      $region19: #{tpu_custom_call.1} parent=15 // pred_region
        %s208 = smul.u32 2, %s20
        %p209 = scmp.lt.s32.totalorder %s19, 1
        %s210 = scalar_select %p209, %s19, 1
        %p211 = scmp.lt.s32.totalorder %s208, 1
        %s212 = scalar_select %p211, %s208, 1
        %s213 = smul.addr %s210, 6
        %s214 = sadd.s32 %s212, %s213
        %s215 = smul.addr %s214, 8
        %s216 = scalar_lea.vmem %s0, %s215
        %s217 = smul.u32 2, %s20
      $region20: #{tpu_custom_call.1} parent=15 // pred_fallthru
        _
      // Predicated region
      $region21: #{tpu_custom_call.1} parent=15 // pred_check
        %p218 = pneg %p74
      $region22: #{tpu_custom_call.1} parent=15 // pred_check_branch
        %220 = sbr.rel (%p218) target = $region24
      $region23: #{tpu_custom_call.1} parent=15 // pred_region
        %s221 = smul.u32 2, %s20
        %p222 = scmp.lt.s32.totalorder %s19, 1
        %s223 = scalar_select %p222, %s19, 1
        %p224 = scmp.lt.s32.totalorder %s221, 1
        %s225 = scalar_select %p224, %s221, 1
        %s226 = smul.addr %s223, 6
        %s227 = sadd.s32 %s225, %s226
        %s228 = smul.addr %s227, 8
        %s229 = scalar_lea.vmem %s1, %s228
        %s230 = smul.u32 2, %s20
      $region24: #{tpu_custom_call.1} parent=15 // pred_fallthru
        _
      // Predicated region
      $region25: #{tpu_custom_call.1} parent=15 // pred_check
        %p231 = pneg %p102
      $region26: #{tpu_custom_call.1} parent=15 // pred_check_branch
        %233 = sbr.rel (%p231) target = $region28
      $region27: #{tpu_custom_call.1} parent=15 // pred_region
        %s234 = smul.u32 2, %s20
        %p235 = scmp.lt.s32.totalorder %s19, 1
        %s236 = scalar_select %p235, %s19, 1
        %p237 = scmp.lt.s32.totalorder %s234, 1
        %s238 = scalar_select %p237, %s234, 1
        %s239 = smul.addr %s236, 2
        %s240 = sadd.s32 %s238, %s239
        %s241 = scalar_lea.vmem %s2, %s240
        %s242 = smul.u32 2, %s20
      $region28: #{tpu_custom_call.1} parent=15 // pred_fallthru
        _
    $region16: #{tpu_custom_call.1} parent=5 // pred_fallthru
      _
    %p243 = scmp.le.s32.totalorder 1, %s12
    %p244 = scmp.lt.s32.totalorder %s12, 3
    %p245 = pnand %p243, %p244
    %p246 = pneg %p245
    // Predicated region
    $region29: #{tpu_custom_call.1} parent=5 // pred_check
      _
    $region30: #{tpu_custom_call.1} parent=5 // pred_check_branch
      %248 = sbr.rel (%p245) target = $region32
    $region31: #{tpu_custom_call.1} parent=5 // pred_region
      %s249 = ssub.s32 %s12, 1
      %s250 = smul.u32 2, %s22
      %p251 = scmp.lt.s32.totalorder %s21, 1
      %s252 = scalar_select %p251, %s21, 1
      %p253 = scmp.lt.s32.totalorder %s250, 1
      %s254 = scalar_select %p253, %s250, 1
      %s255 = smul.addr %s252, 6
      %s256 = sadd.s32 %s254, %s255
      %s257 = smul.addr %s256, 8
      %s258 = scalar_lea.vmem %s0, %s257
      %p259 = pneg %p52
      %p260 = pneg %p49
      %s261 = smul.u32 2, %s22
      %p262 = scmp.lt.s32.totalorder %s21, 1
      %s263 = scalar_select %p262, %s21, 1
      %p264 = scmp.lt.s32.totalorder %s261, 1
      %s265 = scalar_select %p264, %s261, 1
      %s266 = smul.addr %s263, 6
      %s267 = sadd.s32 %s265, %s266
      %s268 = smul.addr %s267, 8
      %s269 = scalar_lea.vmem %s1, %s268
      %p270 = pneg %p80
      %p271 = pneg %p77
      %s272 = smul.u32 2, %s22
      %p273 = scmp.lt.s32.totalorder %s21, 1
      %s274 = scalar_select %p273, %s21, 1
      %p275 = scmp.lt.s32.totalorder %s272, 1
      %s276 = scalar_select %p275, %s272, 1
      %s277 = smul.addr %s274, 2
      %s278 = sadd.s32 %s276, %s277
      %s279 = scalar_lea.vmem %s2, %s278
      %p280 = pneg %p108
      %p281 = pneg %p105
      %p282 = pneg %p134
      %p283 = pneg %p131
      %p284 = scmp.lt.s32.totalorder %s21, 1
      %s285 = scalar_select %p284, %s21, 1
      %s286 = scalar_lea.vmem %s3, %s285
      %p287 = pneg %p160
      %p288 = pneg %p157
      %p289 = scmp.lt.s32.totalorder %s21, 1
      %s290 = scalar_select %p289, %s21, 1
      %s291 = scalar_lea.vmem %s4, %s290
      %p292 = pneg %p186
      %p293 = pneg %p183
      %p294 = scmp.lt.s32.totalorder %s21, 1
      %s295 = scalar_select %p294, %s21, 1
      %s296 = scalar_lea.vmem %s5, %s295
      %s297 = smul.u32 2, %s22
      %p298 = scmp.lt.s32.totalorder %s21, 1
      %s299 = scalar_select %p298, %s21, 1
      %p300 = scmp.lt.s32.totalorder %s297, 1
      %s301 = scalar_select %p300, %s297, 1
      %s302 = smul.addr %s299, 6
      %s303 = sadd.s32 %s301, %s302
      %s304 = smul.addr %s303, 8
      %s305 = scalar_lea.vmem %s0, %s304
      %s306 = smul.u32 2, %s22
      %s307 = smul.u32 2, %s22
      %p308 = scmp.lt.s32.totalorder %s21, 1
      %s309 = scalar_select %p308, %s21, 1
      %p310 = scmp.lt.s32.totalorder %s307, 1
      %s311 = scalar_select %p310, %s307, 1
      %s312 = smul.addr %s309, 6
      %s313 = sadd.s32 %s311, %s312
      %s314 = smul.addr %s313, 8
      %s315 = scalar_lea.vmem %s1, %s314
      %s316 = smul.u32 2, %s22
      %s317 = smul.u32 2, %s22
      %p318 = scmp.lt.s32.totalorder %s21, 1
      %s319 = scalar_select %p318, %s21, 1
      %p320 = scmp.lt.s32.totalorder %s317, 1
      %s321 = scalar_select %p320, %s317, 1
      %s322 = smul.addr %s319, 2
      %s323 = sadd.s32 %s321, %s322
      %s324 = scalar_lea.vmem %s2, %s323
      %s325 = smul.u32 2, %s22
      %p326 = scmp.lt.s32.totalorder %s21, 1
      %s327 = scalar_select %p326, %s21, 1
      %s328 = scalar_lea.vmem %s3, %s327
      %p329 = scmp.lt.s32.totalorder %s21, 1
      %s330 = scalar_select %p329, %s21, 1
      %s331 = scalar_lea.vmem %s4, %s330
      %p332 = scmp.lt.s32.totalorder %s21, 1
      %s333 = scalar_select %p332, %s21, 1
      %s334 = scalar_lea.vmem %s5, %s333
      %p335 = scmp.eq.s32.totalorder %s22, 0
      // Predicated region
      $region33: #{tpu_custom_call.1} parent=31 // pred_check
        %p336 = pneg %p335
      $region34: #{tpu_custom_call.1} parent=31 // pred_check_branch
        %338 = sbr.rel (%p336) target = $region36
      $region35: #{tpu_custom_call.1} parent=31 // pred_region
        %v339 = vlaneseq
        %vm340 = vcmp.ge.s32.totalorder %v339, 0
        %vm341 = vcmp.lt.s32.totalorder %v339, 256
        %vm342 = vmand %vm340, %vm341
        %343 = vst.msk [vmem:[#allocation2] sm:$0x3] %vm342, 0.0
        %344 = vst.msk [vmem:[#allocation3] sm:$0x3] %vm342, 0.0
        %345 = vst.msk [vmem:[#allocation4] sm:$0x3] %vm342, 0.0
      $region36: #{tpu_custom_call.1} parent=31 // pred_fallthru
        _
      %v346 = vld [vmem:[%s324] sm:$0x3]
      %vm347 = vcmp.ne.s32.totalorder %v346, 255
      %v348 = vlaneseq
      %v349 = vshrl.u32 %v348, 7
      %v350 = vadd.s32 %v349, 8
      %v351 = vadd.s32 %v349, 16
      %v352 = vlaneseq
      %v353 = vshrl.u32 %v352, 7
      %v354 = vsub.s32 0, %v353
      %v355 = vrot.slane %v346, %v354
      %v356 = vlaneseq
      %v357 = vshrl.u32 %v356, 7
      %v358 = vsub.s32 1, %v357
      %v359 = vrot.slane %v346, %v358
      %vm360 = vcmp.eq.s32.totalorder %v349, %v355
      %vm361 = vcmp.eq.s32.totalorder %v349, %v359
      %vm362 = vcmp.eq.s32.totalorder %v350, %v355
      %vm363 = vcmp.eq.s32.totalorder %v350, %v359
      %vm364 = vcmp.eq.s32.totalorder %v351, %v355
      %vm365 = vcmp.eq.s32.totalorder %v351, %v359
      %v366 = vsel %vm360, 1, 0
      %v367 = vsel %vm361, 1, 0
      %v368 = vsel %vm362, 1, 0
      %v369 = vsel %vm363, 1, 0
      %v370 = vsel %vm364, 1, 0
      %v371 = vsel %vm365, 1, 0
      %v372 = vcvt.s32.f32 %v366
      %v373 = vcvt.s32.f32 %v367
      %v374 = vcvt.s32.f32 %v368
      %v375 = vcvt.s32.f32 %v369
      %v376 = vcvt.s32.f32 %v370
      %v377 = vcvt.s32.f32 %v371
      %v378 = vld [vmem:[%s305] sm:$0xff]
      %v379 = vld [vmem:[%s305 + $0x8] sm:$0xff]
      %v380 = vld [vmem:[%s305 + $0x10] sm:$0xff]
      %v381 = vld [vmem:[%s305 + $0x18] sm:$0xff]
      %v382 = vld [vmem:[%s305 + $0x20] sm:$0x7]
      %v383 = vld [vmem:[%s305 + $0x28] sm:$0x7]
      %vm384 = vcmask 1042432
      %v385 = vsel %vm384, %v382, -inf
      %v386 = vmax.f32 %v378, %v385
      %v387 = vmax.f32 %v386, %v380
      %v388 = vrot.slane %v387, 4
      %v389 = vmax.f32 %v387, %v388
      %v390 = vrot.slane %v389, 2
      %v391 = vmax.f32 %v389, %v390
      %v392 = vrot.slane %v391, 1
      %v393 = vmax.f32 %v391, %v392
      %v394 = vsel %vm384, %v383, -inf
      %v395 = vmax.f32 %v379, %v394
      %v396 = vmax.f32 %v395, %v381
      %v397 = vrot.slane %v396, 4
      %v398 = vmax.f32 %v396, %v397
      %v399 = vrot.slane %v398, 2
      %v400 = vmax.f32 %v398, %v399
      %v401 = vrot.slane %v400, 1
      %v402 = vmax.f32 %v400, %v401
      %v403 = vsub.f32 %v378, %v393
      %v404 = vsub.f32 %v379, %v402
      %v405 = vsub.f32 %v380, %v393
      %v406 = vsub.f32 %v381, %v402
      %v407 = vsub.f32 %v382, %v393
      %v408 = vsub.f32 %v383, %v402
      %v409 = vmul.f32 %v403, 1.442695
      %v410 = vpow.pop %v409
      %v411 = vmul.f32 %v404, 1.442695
      %v412 = vpow.pop %v411
      %v413 = vmul.f32 %v405, 1.442695
      %v414 = vpow.pop %v413
      %v415 = vmul.f32 %v406, 1.442695
      %v416 = vpow.pop %v415
      %v417 = vmul.f32 %v407, 1.442695
      %v418 = vpow.pop %v417
      %v419 = vmul.f32 %v408, 1.442695
      %v420 = vpow.pop %v419
      %v421 = vadd.f32 %v410, %v414
      %v422 = vsel %vm384, %v418, 0.0
      %v423 = vadd.f32 %v421, %v422
      %v424 = vrot.slane %v423, 4
      %v425 = vadd.f32 %v423, %v424
      %v426 = vrot.slane %v425, 2
      %v427 = vadd.f32 %v425, %v426
      %v428 = vrot.slane %v427, 1
      %v429 = vadd.f32 %v427, %v428
      %v430 = vadd.f32 %v412, %v416
      %v431 = vsel %vm384, %v420, 0.0
      %v432 = vadd.f32 %v430, %v431
      %v433 = vrot.slane %v432, 4
      %v434 = vadd.f32 %v432, %v433
      %v435 = vrot.slane %v434, 2
      %v436 = vadd.f32 %v434, %v435
      %v437 = vrot.slane %v436, 1
      %v438 = vadd.f32 %v436, %v437
      %v439 = vlog2.pop %v429
      %v440 = vmul.f32 %v439, 0.6931472
      %v441 = vlog2.pop %v438
      %v442 = vmul.f32 %v441, 0.6931472
      %v443 = vadd.f32 %v393, %v440
      %v444 = vadd.f32 %v402, %v442
      %v445 = vmul.f32 %v372, %v378
      %v446 = vmul.f32 %v373, %v379
      %v447 = vmul.f32 %v374, %v380
      %v448 = vmul.f32 %v375, %v381
      %v449 = vmul.f32 %v376, %v382
      %v450 = vmul.f32 %v377, %v383
      %v451 = vadd.f32 %v445, %v447
      %v452 = vsel %vm384, %v449, 0.0
      %v453 = vadd.f32 %v451, %v452
      %v454 = vrot.slane %v453, 4
      %v455 = vadd.f32 %v453, %v454
      %v456 = vrot.slane %v455, 2
      %v457 = vadd.f32 %v455, %v456
      %v458 = vrot.slane %v457, 1
      %v459 = vadd.f32 %v457, %v458
      %v460 = vadd.f32 %v446, %v448
      %v461 = vsel %vm384, %v450, 0.0
      %v462 = vadd.f32 %v460, %v461
      %v463 = vrot.slane %v462, 4
      %v464 = vadd.f32 %v462, %v463
      %v465 = vrot.slane %v464, 2
      %v466 = vadd.f32 %v464, %v465
      %v467 = vrot.slane %v466, 1
      %v468 = vadd.f32 %v466, %v467
      %v469 = vsub.f32 %v443, %v459
      %v470 = vsub.f32 %v444, %v468
      %v473 = vcombine.low %v469, %v470
      %v475 = vunpack.c.l.s4 1966171168
      %v476 = vunpack.c.0.s8 %v475
      %v477 = vlaneseq
      %v478 = vshrl.u32 %v477, 7
      %v479 = vsub.s32 %v476, %v478
      %v480 = vrot.slane %v473, %v479
      %v482 = vunpack.c.l.s4 1966171168
      %v483 = vunpack.c.0.s8 %v482
      %v484 = vlaneseq
      %v485 = vshrl.u32 %v484, 7
      %v486 = vsub.s32 %v483, %v485
      %v487 = vrot.slane %v480, %v486
      %v489 = vsel %vm347, %v487, 0.0
      %v490 = vld [vmem:[%s315] sm:$0xff]
      %v491 = vld [vmem:[%s315 + $0x8] sm:$0xff]
      %v492 = vld [vmem:[%s315 + $0x10] sm:$0xff]
      %v493 = vld [vmem:[%s315 + $0x18] sm:$0xff]
      %v494 = vld [vmem:[%s315 + $0x20] sm:$0x7]
      %v495 = vld [vmem:[%s315 + $0x28] sm:$0x7]
      %v496 = vsel %vm384, %v494, -inf
      %v497 = vmax.f32 %v490, %v496
      %v498 = vmax.f32 %v497, %v492
      %v499 = vrot.slane %v498, 4
      %v500 = vmax.f32 %v498, %v499
      %v501 = vrot.slane %v500, 2
      %v502 = vmax.f32 %v500, %v501
      %v503 = vrot.slane %v502, 1
      %v504 = vmax.f32 %v502, %v503
      %v505 = vsel %vm384, %v495, -inf
      %v506 = vmax.f32 %v491, %v505
      %v507 = vmax.f32 %v506, %v493
      %v508 = vrot.slane %v507, 4
      %v509 = vmax.f32 %v507, %v508
      %v510 = vrot.slane %v509, 2
      %v511 = vmax.f32 %v509, %v510
      %v512 = vrot.slane %v511, 1
      %v513 = vmax.f32 %v511, %v512
      %v514 = vsub.f32 %v490, %v504
      %v515 = vsub.f32 %v491, %v513
      %v516 = vsub.f32 %v492, %v504
      %v517 = vsub.f32 %v493, %v513
      %v518 = vsub.f32 %v494, %v504
      %v519 = vsub.f32 %v495, %v513
      %v520 = vmul.f32 %v514, 1.442695
      %v521 = vpow.pop %v520
      %v522 = vmul.f32 %v515, 1.442695
      %v523 = vpow.pop %v522
      %v524 = vmul.f32 %v516, 1.442695
      %v525 = vpow.pop %v524
      %v526 = vmul.f32 %v517, 1.442695
      %v527 = vpow.pop %v526
      %v528 = vmul.f32 %v518, 1.442695
      %v529 = vpow.pop %v528
      %v530 = vmul.f32 %v519, 1.442695
      %v531 = vpow.pop %v530
      %v532 = vadd.f32 %v521, %v525
      %v533 = vsel %vm384, %v529, 0.0
      %v534 = vadd.f32 %v532, %v533
      %v535 = vrot.slane %v534, 4
      %v536 = vadd.f32 %v534, %v535
      %v537 = vrot.slane %v536, 2
      %v538 = vadd.f32 %v536, %v537
      %v539 = vrot.slane %v538, 1
      %v540 = vadd.f32 %v538, %v539
      %v541 = vadd.f32 %v523, %v527
      %v542 = vsel %vm384, %v531, 0.0
      %v543 = vadd.f32 %v541, %v542
      %v544 = vrot.slane %v543, 4
      %v545 = vadd.f32 %v543, %v544
      %v546 = vrot.slane %v545, 2
      %v547 = vadd.f32 %v545, %v546
      %v548 = vrot.slane %v547, 1
      %v549 = vadd.f32 %v547, %v548
      %v550 = vlog2.pop %v540
      %v551 = vmul.f32 %v550, 0.6931472
      %v552 = vlog2.pop %v549
      %v553 = vmul.f32 %v552, 0.6931472
      %v554 = vadd.f32 %v504, %v551
      %v555 = vadd.f32 %v513, %v553
      %v556 = vmul.f32 %v372, %v490
      %v557 = vmul.f32 %v373, %v491
      %v558 = vmul.f32 %v374, %v492
      %v559 = vmul.f32 %v375, %v493
      %v560 = vmul.f32 %v376, %v494
      %v561 = vmul.f32 %v377, %v495
      %v562 = vadd.f32 %v556, %v558
      %v563 = vsel %vm384, %v560, 0.0
      %v564 = vadd.f32 %v562, %v563
      %v565 = vrot.slane %v564, 4
      %v566 = vadd.f32 %v564, %v565
      %v567 = vrot.slane %v566, 2
      %v568 = vadd.f32 %v566, %v567
      %v569 = vrot.slane %v568, 1
      %v570 = vadd.f32 %v568, %v569
      %v571 = vadd.f32 %v557, %v559
      %v572 = vsel %vm384, %v561, 0.0
      %v573 = vadd.f32 %v571, %v572
      %v574 = vrot.slane %v573, 4
      %v575 = vadd.f32 %v573, %v574
      %v576 = vrot.slane %v575, 2
      %v577 = vadd.f32 %v575, %v576
      %v578 = vrot.slane %v577, 1
      %v579 = vadd.f32 %v577, %v578
      %v580 = vsub.f32 %v554, %v570
      %v581 = vsub.f32 %v555, %v579
      %v584 = vcombine.low %v580, %v581
      %v586 = vunpack.c.l.s4 1966171168
      %v587 = vunpack.c.0.s8 %v586
      %v588 = vlaneseq
      %v589 = vshrl.u32 %v588, 7
      %v590 = vsub.s32 %v587, %v589
      %v591 = vrot.slane %v584, %v590
      %v593 = vunpack.c.l.s4 1966171168
      %v594 = vunpack.c.0.s8 %v593
      %v595 = vlaneseq
      %v596 = vshrl.u32 %v595, 7
      %v597 = vsub.s32 %v594, %v596
      %v598 = vrot.slane %v591, %v597
      %v600 = vsel %vm347, %v598, 0.0
      %v601 = vsel %vm347, 1, 0
      %v602 = vcvt.s32.f32 %v601
      %v603 = vld [vmem:[#allocation2] sm:$0x3]
      %v604 = vadd.f32 %v603, %v489
      %v605 = vlaneseq
      %vm606 = vcmp.ge.s32.totalorder %v605, 0
      %vm607 = vcmp.lt.s32.totalorder %v605, 256
      %vm608 = vmand %vm606, %vm607
      %609 = vst.msk [vmem:[#allocation2] sm:$0x3] %vm608, %v604
      %v610 = vld [vmem:[#allocation3] sm:$0x3]
      %v611 = vadd.f32 %v610, %v600
      %612 = vst.msk [vmem:[#allocation3] sm:$0x3] %vm608, %v611
      %v613 = vld [vmem:[#allocation4] sm:$0x3]
      %v614 = vadd.f32 %v613, %v602
      %615 = vst.msk [vmem:[#allocation4] sm:$0x3] %vm608, %v614
      // Predicated region
      $region37: #{tpu_custom_call.1} parent=31 // pred_check
        %p616 = pneg %p335
      $region38: #{tpu_custom_call.1} parent=31 // pred_check_branch
        %618 = sbr.rel (%p616) target = $region40
      $region39: #{tpu_custom_call.1} parent=31 // pred_region
        %v619 = vld [vmem:[#allocation2] sm:$0x3]
        %v621 = vlaneseq
        %v622 = vshrl.u32 %v621, 7
        %v623 = vsub.s32 0, %v622
        %v624 = vrot.slane %v619, %v623
        %v625 = vlaneseq
        %v626 = vshrl.u32 %v625, 7
        %v627 = vsub.s32 1, %v626
        %v628 = vrot.slane %v619, %v627
        %vm631 = vcmask 1040384
        %v632 = vsel %vm631, %v624, 0.0
        %v633 = vsel %vm631, %v628, 0.0
        %v634 = vadd.f32 %v632, %v633
        %635 = vadd.xlane.f32.xlu0 %v634
        %v636 = vpop.xlane.xlu0 %635
        %vm637 = vcmask 0
        %638 = vst.msk [vmem:[%s328] sm:$0x1] %vm637, %v636
        %v639 = vld [vmem:[#allocation3] sm:$0x3]
        %v641 = vlaneseq
        %v642 = vshrl.u32 %v641, 7
        %v643 = vsub.s32 0, %v642
        %v644 = vrot.slane %v639, %v643
        %v645 = vlaneseq
        %v646 = vshrl.u32 %v645, 7
        %v647 = vsub.s32 1, %v646
        %v648 = vrot.slane %v639, %v647
        %v651 = vsel %vm631, %v644, 0.0
        %v652 = vsel %vm631, %v648, 0.0
        %v653 = vadd.f32 %v651, %v652
        %654 = vadd.xlane.f32.xlu0 %v653
        %v655 = vpop.xlane.xlu0 %654
        %656 = vst.msk [vmem:[%s331] sm:$0x1] %vm637, %v655
        %v657 = vld [vmem:[#allocation4] sm:$0x3]
        %v659 = vlaneseq
        %v660 = vshrl.u32 %v659, 7
        %v661 = vsub.s32 0, %v660
        %v662 = vrot.slane %v657, %v661
        %v663 = vlaneseq
        %v664 = vshrl.u32 %v663, 7
        %v665 = vsub.s32 1, %v664
        %v666 = vrot.slane %v657, %v665
        %v669 = vsel %vm631, %v662, 0.0
        %v670 = vsel %vm631, %v666, 0.0
        %v671 = vadd.f32 %v669, %v670
        %672 = vadd.xlane.f32.xlu0 %v671
        %v673 = vpop.xlane.xlu0 %672
        %674 = vst.msk [vmem:[%s334] sm:$0x1] %vm637, %v673
      $region40: #{tpu_custom_call.1} parent=31 // pred_fallthru
        _
      %p675 = scmp.lt.s32.totalorder %s21, 1
      %s676 = scalar_select %p675, %s21, 1
      %s677 = scalar_lea.vmem %s3, %s676
      %p678 = scmp.lt.s32.totalorder %s21, 1
      %s679 = scalar_select %p678, %s21, 1
      %s680 = scalar_lea.vmem %s4, %s679
      %p681 = scmp.lt.s32.totalorder %s21, 1
      %s682 = scalar_select %p681, %s21, 1
      %s683 = scalar_lea.vmem %s5, %s682
      // Predicated region
      $region41: #{tpu_custom_call.1} parent=31 // pred_check
        %p684 = pneg %p131
      $region42: #{tpu_custom_call.1} parent=31 // pred_check_branch
        %686 = sbr.rel (%p684) target = $region44
      $region43: #{tpu_custom_call.1} parent=31 // pred_region
        _
      $region44: #{tpu_custom_call.1} parent=31 // pred_fallthru
        _
      // Predicated region
      $region45: #{tpu_custom_call.1} parent=31 // pred_check
        %p687 = pneg %p157
      $region46: #{tpu_custom_call.1} parent=31 // pred_check_branch
        %689 = sbr.rel (%p687) target = $region48
      $region47: #{tpu_custom_call.1} parent=31 // pred_region
        _
      $region48: #{tpu_custom_call.1} parent=31 // pred_fallthru
        _
      // Predicated region
      $region49: #{tpu_custom_call.1} parent=31 // pred_check
        %p690 = pneg %p183
      $region50: #{tpu_custom_call.1} parent=31 // pred_check_branch
        %692 = sbr.rel (%p690) target = $region52
      $region51: #{tpu_custom_call.1} parent=31 // pred_region
        _
      $region52: #{tpu_custom_call.1} parent=31 // pred_fallthru
        _
    $region32: #{tpu_custom_call.1} parent=5 // pred_fallthru
      _
    %p693 = scmp.le.s32.totalorder 2, %s12
    // Predicated region
    $region53: #{tpu_custom_call.1} parent=5 // pred_check
      %p694 = pneg %p693
    $region54: #{tpu_custom_call.1} parent=5 // pred_check_branch
      %696 = sbr.rel (%p694) target = $region56
    $region55: #{tpu_custom_call.1} parent=5 // pred_region
      %s697 = ssub.s32 %s12, 2
      // Predicated region
      $region57: #{tpu_custom_call.1} parent=55 // pred_check
        %p698 = pneg %p137
      $region58: #{tpu_custom_call.1} parent=55 // pred_check_branch
        %700 = sbr.rel (%p698) target = $region60
      $region59: #{tpu_custom_call.1} parent=55 // pred_region
        %p701 = scmp.lt.s32.totalorder %s23, 1
        %s702 = scalar_select %p701, %s23, 1
        %s703 = scalar_lea.vmem %s3, %s702
      $region60: #{tpu_custom_call.1} parent=55 // pred_fallthru
        _
      // Predicated region
      $region61: #{tpu_custom_call.1} parent=55 // pred_check
        %p704 = pneg %p163
      $region62: #{tpu_custom_call.1} parent=55 // pred_check_branch
        %706 = sbr.rel (%p704) target = $region64
      $region63: #{tpu_custom_call.1} parent=55 // pred_region
        %p707 = scmp.lt.s32.totalorder %s23, 1
        %s708 = scalar_select %p707, %s23, 1
        %s709 = scalar_lea.vmem %s4, %s708
      $region64: #{tpu_custom_call.1} parent=55 // pred_fallthru
        _
      // Predicated region
      $region65: #{tpu_custom_call.1} parent=55 // pred_check
        %p710 = pneg %p189
      $region66: #{tpu_custom_call.1} parent=55 // pred_check_branch
        %712 = sbr.rel (%p710) target = $region68
      $region67: #{tpu_custom_call.1} parent=55 // pred_region
        %p713 = scmp.lt.s32.totalorder %s23, 1
        %s714 = scalar_select %p713, %s23, 1
        %s715 = scalar_lea.vmem %s5, %s714
      $region68: #{tpu_custom_call.1} parent=55 // pred_fallthru
        _
    $region56: #{tpu_custom_call.1} parent=5 // pred_fallthru
      _
  $region6: #{tpu_custom_call.1} parent=0 // loop_footer
    %s16 = sadd.s32 1, %s12
  $region7: #{tpu_custom_call.1} parent=0 // loop_footer_branch
    %11 = sbr.rel target = $region3
  $region8: #{tpu_custom_call.1} parent=0 // loop_exit
    _

</llo_original>
